<compile_context>
chip_gen: v7x
topology: tpu7x:2x2x1
jax: 0.10.0
libtpu: 0.0.40
codegen_flags: <defaults>
</compile_context>

<pallas_src>
import math
import functools

import jax
import jax.numpy as jnp
from jax.experimental import pallas as pl
from jax.experimental.pallas import tpu as pltpu


def _residual_block_kernel(x_ref, w1_ref, b1_ref, w2_ref, b2_ref, out_ref,
                           slab_sc, *opt_scratch,
                           NB, H, WC, K, neg_slope, fold_taps):
    """One grid step = NB images packed into one padded slab.

    x_ref  : (NB, H, W*C)      f32 input rows (unpadded)
    w1/w2  : (K*W*C, W*C)      bf16 block-banded weight slabs (taps stacked along rows)
    b1/b2  : (1, W*C)          f32 biases tiled over W
    out_ref: (NB, H, W*C)      f32 output rows
    slab_sc: (NB*H+(NB+1)*p, W*C) bf16 scratch, packed images with zero halo/gap rows
    opt_scratch[0] (fold_taps only): (M, K*W*C) bf16 im2row scratch
    """
    p = K // 2
    stride = H + p                       # row pitch of one image inside the packed slab
    R = NB * H + (NB - 1) * p            # rows produced by each shifted matmul
    im2row_sc = opt_scratch[0] if fold_taps else None

    # Zero only the (NB+1)*p halo/gap rows (they isolate adjacent images and realise the
    # H-direction 'same' padding).  Re-zeroed every step - cheap, and stays correct when
    # the batch axis is core-sharded under "parallel" semantics.
    zgap = jnp.zeros((p, WC), slab_sc.dtype)
    for g in range(NB + 1):
        slab_sc[g * stride:g * stride + p, :] = zgap

    # Pack the NB images into the slab, casting f32 -> bf16 exactly once.
    for i in range(NB):
        slab_sc[p + i * stride:p + i * stride + H, :] = x_ref[i].astype(slab_sc.dtype)

    def conv(w_ref, b_ref):
        if fold_taps:
            # im2row: the K vertical taps side-by-side -> one 384-deep contraction
            # (fills the 256-deep MXU on v6e/v7x; a single RHS push per conv).
            for dy in range(K):
                im2row_sc[:, dy * WC:(dy + 1) * WC] = slab_sc[dy:dy + R, :]
            acc = jnp.dot(im2row_sc[...], w_ref[...],
                          preferred_element_type=jnp.float32)
        else:
            # K shifted (R, WC) x (WC, WC) matmuls; the += form lets v7x accumulate in
            # the MRB, and a 128-deep contraction exactly fills v5e's 128x128 MXU.
            acc = jnp.zeros((R, WC), jnp.float32)
            for dy in range(K):
                acc = acc + jnp.dot(slab_sc[dy:dy + R, :],
                                    w_ref[dy * WC:(dy + 1) * WC, :],
                                    preferred_element_type=jnp.float32)
        return acc + b_ref[...]

    # conv1 + leaky_relu (negative_slope = 0.01, PyTorch default)
    y = conv(w1_ref, b1_ref)
    y = jnp.where(y >= 0, y, neg_slope * y)

    # Overwrite the image rows of the slab with the activations (gap rows stay zero).
    # x will be re-read from x_ref for the residual, so one scratch slab suffices.
    for i in range(NB):
        slab_sc[p + i * stride:p + i * stride + H, :] = (
            y[i * stride:i * stride + H, :].astype(slab_sc.dtype))

    # conv2 (for odd K, conv2 padding (K-1)//2 == conv1 padding K//2)
    acc2 = conv(w2_ref, b2_ref)

    # Residual add in f32; x re-read late from VMEM to keep vreg pressure low at large NB.
    for i in range(NB):
        out_ref[i] = (x_ref[i] + acc2[i * stride:i * stride + H, :]).astype(out_ref.dtype)


def _banded_weights(wt, W, C, K):
    """Fold (K, K, Cin, Cout) conv weights into K block-banded slabs (K, W*Cin, W*Cout).

    B[dy, w_in*C + cin, w_out*C + cout] = wt[dy, w_in - w_out + p, cin, cout]
    when 0 <= w_in - w_out + p < K, else 0 (implicitly realises the W zero padding).
    """
    p = K // 2
    w_in = jnp.arange(W)[:, None]
    w_out = jnp.arange(W)[None, :]
    dx = w_in - w_out + p                                  # (W, W)
    valid = (dx >= 0) & (dx < K)
    dx_c = jnp.where(valid, dx, 0)
    B = wt[:, dx_c]                                        # (K, W_in, W_out, Cin, Cout)
    B = B * valid[None, :, :, None, None].astype(wt.dtype)
    B = jnp.transpose(B, (0, 1, 3, 2, 4))                  # (K, W_in, Cin, W_out, Cout)
    return B.reshape(K, W * C, W * C)


def _pick_image_tile(N, H, target_rows=256, min_grid_steps=2):
    """Largest divisor NB of N with NB*H <= target_rows, keeping >=2 grid steps if possible."""
    divs = [d for d in range(1, N + 1) if N % d == 0]
    fits = [d for d in divs if d * H <= target_rows] or [1]
    nb = max(fits)
    if N // nb < min_grid_steps:
        alts = [d for d in fits if N // d >= min_grid_steps]
        if alts:
            nb = max(alts)
    return nb


def _default_fold_taps():
    """Fold the K taps into one deep contraction only on deep-MXU chips (v6e / v7x)."""
    try:
        kind = jax.devices()[0].device_kind.lower()
    except Exception:
        return False
    return ("v6" in kind) or ("v7" in kind)


def residual_block(x_nchw, w1, b1, w2, b2, *, kernel_size=3, neg_slope=0.01,
                   images_per_step=None, fold_taps=None):
    """x_nchw: (N, C, H, W) float32. Weights: (K, K, Cin, Cout). Biases: (C,)."""
    N, C, H, W = x_nchw.shape
    K = kernel_size
    assert K % 2 == 1, "kernel assumes odd kernel_size (conv1 pad K//2 == conv2 pad (K-1)//2)"
    p = K // 2
    WC = W * C

    NB = _pick_image_tile(N, H) if images_per_step is None else images_per_step
    assert N % NB == 0, "images_per_step must divide the batch"
    if fold_taps is None:
        # Deep contraction only pays off if WC alone does not already fill the MXU depth.
        fold_taps = _default_fold_taps() and (WC < 256)

    # glue: NCHW -> NHWC rows (lane-dense last dim W*C)
    x_rows = jnp.transpose(x_nchw, (0, 2, 3, 1)).reshape(N, H, WC).astype(jnp.float32)

    # Pre-fold conv weights into bf16 banded slabs (taps stacked along the contraction
    # axis so the same (K*WC, WC) array serves both the folded and per-tap paths).
    B1 = _banded_weights(w1.astype(jnp.float32), W, C, K).astype(jnp.bfloat16).reshape(K * WC, WC)
    B2 = _banded_weights(w2.astype(jnp.float32), W, C, K).astype(jnp.bfloat16).reshape(K * WC, WC)
    b1_wc = jnp.tile(b1.astype(jnp.float32), W).reshape(1, WC)
    b2_wc = jnp.tile(b2.astype(jnp.float32), W).reshape(1, WC)

    Rpad = NB * H + (NB + 1) * p          # packed slab rows (images + halos/gaps)
    R = Rpad - 2 * p                      # shifted-matmul output rows

    kern = functools.partial(_residual_block_kernel, NB=NB, H=H, WC=WC, K=K,
                             neg_slope=neg_slope, fold_taps=fold_taps)

    scratch = [pltpu.VMEM((Rpad, WC), jnp.bfloat16)]       # packed x / activation slab
    if fold_taps:
        scratch.append(pltpu.VMEM((R, K * WC), jnp.bfloat16))  # im2row slab

    out_rows = pl.pallas_call(
        kern,
        out_shape=jax.ShapeDtypeStruct((N, H, WC), jnp.float32),
        grid_spec=pltpu.PrefetchScalarGridSpec(
            num_scalar_prefetch=0,
            grid=(N // NB,),
            in_specs=[
                pl.BlockSpec((NB, H, WC), lambda n: (n, 0, 0)),
                pl.BlockSpec((K * WC, WC), lambda n: (0, 0)),
                pl.BlockSpec((1, WC), lambda n: (0, 0)),
                pl.BlockSpec((K * WC, WC), lambda n: (0, 0)),
                pl.BlockSpec((1, WC), lambda n: (0, 0)),
            ],
            out_specs=pl.BlockSpec((NB, H, WC), lambda n: (n, 0, 0)),
            scratch_shapes=scratch,
        ),
        compiler_params=pltpu.CompilerParams(
            dimension_semantics=("parallel",)),
    )(x_rows, B1, b1_wc, B2, b2_wc)

    # glue: rows -> NHWC -> NCHW
    return jnp.transpose(out_rows.reshape(N, H, W, C), (0, 3, 1, 2))


# ---------------- pure-JAX reference (for verification) ----------------
def _conv_same_ref(x_nhwc, w, b, K):
    N, H, W, C = x_nhwc.shape
    pad = K // 2
    xp = jnp.pad(x_nhwc, ((0, 0), (pad, pad), (pad, pad), (0, 0)))
    out = jnp.zeros((N, H, W, w.shape[-1]), jnp.float32)
    for dy in range(K):
        for dx in range(K):
            out = out + jnp.einsum('nhwc,cd->nhwd',
                                   xp[:, dy:dy + H, dx:dx + W, :], w[dy, dx])
    return out + b[None, None, None, :]


def residual_block_ref(x_nchw, w1, b1, w2, b2, *, kernel_size=3, neg_slope=0.01):
    x = jnp.transpose(x_nchw, (0, 2, 3, 1)).astype(jnp.float32)
    y = _conv_same_ref(x, w1, b1, kernel_size)
    y = jnp.where(y >= 0, y, neg_slope * y)
    y = _conv_same_ref(y, w2, b2, kernel_size)
    return jnp.transpose(x + y, (0, 3, 1, 2))


if __name__ == "__main__":
    # Small shapes consistent with the module: batch=2, base_channel=8, spatial=16x16
    # (W*C = 128 -> exactly one full lane group per row).
    N, C, H, W = 2, 8, 16, 16
    K = 3
    scale = 0.1  # initialize_weights([...], 0.1)

    key = jax.random.PRNGKey(0)
    kx, kw1, kw2 = jax.random.split(key, 3)

    x = jax.random.normal(kx, (N, C, H, W), dtype=jnp.float32)

    # kaiming_normal_(a=0, mode='fan_in'): std = sqrt(2 / (Cin*K*K)), then *= scale.
    fan_in = C * K * K
    std = math.sqrt(2.0 / fan_in) * scale
    # weights stored as (K, K, Cin, Cout)
    w1 = jax.random.normal(kw1, (K, K, C, C), dtype=jnp.float32) * std
    w2 = jax.random.normal(kw2, (K, K, C, C), dtype=jnp.float32) * std
    b1 = jnp.zeros((C,), jnp.float32)  # Conv2d biases zeroed by initialize_weights
    b2 = jnp.zeros((C,), jnp.float32)

    out = residual_block(x, w1, b1, w2, b2, kernel_size=K)
    out = jax.block_until_ready(out)

    ref = residual_block_ref(x, w1, b1, w2, b2, kernel_size=K)
    assert out.shape == (N, C, H, W)
    # Tolerance loosened vs f32 reference because matmul operands are bf16 (f32 accumulate).
    assert jnp.allclose(out, ref, atol=5e-3, rtol=1e-2), "mismatch vs reference"

    print("KERNEL_OK")
</pallas_src>

<mosaic_0001>
module attributes {stable_mosaic.version = 11 : i64} {
  func.func @_residual_block_kernel(%arg0: i32, %arg1: memref<1x16x128xf32, #tpu.memory_space<vmem>>, %arg2: memref<384x128xbf16, #tpu.memory_space<vmem>>, %arg3: memref<1x128xf32, #tpu.memory_space<vmem>>, %arg4: memref<384x128xbf16, #tpu.memory_space<vmem>>, %arg5: memref<1x128xf32, #tpu.memory_space<vmem>>, %arg6: memref<1x16x128xf32, #tpu.memory_space<vmem>>, %arg7: memref<18x128xbf16, #tpu.memory_space<vmem>>) attributes {dimension_semantics = [#tpu.dimension_semantics<parallel>], iteration_bounds = array<i64: 2>, scalar_prefetch = 0 : i64, scratch_operands = 1 : i64, tpu.core_type = #tpu.core_type<tc>, window_params = [{transform_indices = @transform_0, window_bounds = array<i64: 1, 16, 128>}, {pipeline_mode = #tpu.pipeline_mode<synchronous>, transform_indices = @transform_1, window_bounds = array<i64: 384, 128>}, {pipeline_mode = #tpu.pipeline_mode<synchronous>, transform_indices = @transform_2, window_bounds = array<i64: 1, 128>}, {pipeline_mode = #tpu.pipeline_mode<synchronous>, transform_indices = @transform_3, window_bounds = array<i64: 384, 128>}, {pipeline_mode = #tpu.pipeline_mode<synchronous>, transform_indices = @transform_4, window_bounds = array<i64: 1, 128>}, {transform_indices = @transform_5, window_bounds = array<i64: 1, 16, 128>}]} {
    %cst = arith.constant 0.000000e+00 : bf16
    %0 = vector.broadcast %cst : bf16 to vector<1x128xbf16>
    %c0 = arith.constant 0 : index
    %c0_0 = arith.constant 0 : index
    %1 = vector.load %arg7[%c0, %c0_0] : memref<18x128xbf16, #tpu.memory_space<vmem>>, vector<1x128xbf16>
    tpu.vector_store %arg7[%c0, %c0_0], %0 {strides = array<i32>} : memref<18x128xbf16, #tpu.memory_space<vmem>>, vector<1x128xbf16>,
    %c17 = arith.constant 17 : index
    %c0_1 = arith.constant 0 : index
    %2 = vector.load %arg7[%c17, %c0_1] : memref<18x128xbf16, #tpu.memory_space<vmem>>, vector<1x128xbf16>
    tpu.vector_store %arg7[%c17, %c0_1], %0 {strides = array<i32>} : memref<18x128xbf16, #tpu.memory_space<vmem>>, vector<1x128xbf16>,
    %c0_2 = arith.constant 0 : index
    %c0_3 = arith.constant 0 : index
    %c0_4 = arith.constant 0 : index
    %3 = vector.load %arg1[%c0_2, %c0_3, %c0_4] : memref<1x16x128xf32, #tpu.memory_space<vmem>>, vector<1x16x128xf32>
    %4 = vector.shape_cast %3 : vector<1x16x128xf32> to vector<16x128xf32>
    %5 = arith.truncf %4 : vector<16x128xf32> to vector<16x128xbf16>
    %c1 = arith.constant 1 : index
    %c0_5 = arith.constant 0 : index
    %6 = vector.load %arg7[%c1, %c0_5] : memref<18x128xbf16, #tpu.memory_space<vmem>>, vector<16x128xbf16>
    tpu.vector_store %arg7[%c1, %c0_5], %5 {strides = array<i32>} : memref<18x128xbf16, #tpu.memory_space<vmem>>, vector<16x128xbf16>,
    %cst_6 = arith.constant 0.000000e+00 : f32
    %7 = vector.broadcast %cst_6 : f32 to vector<16x128xf32>
    %c0_7 = arith.constant 0 : index
    %c0_8 = arith.constant 0 : index
    %8 = vector.load %arg7[%c0_7, %c0_8] : memref<18x128xbf16, #tpu.memory_space<vmem>>, vector<16x128xbf16>
    %c0_9 = arith.constant 0 : index
    %c0_10 = arith.constant 0 : index
    %9 = vector.load %arg2[%c0_9, %c0_10] : memref<384x128xbf16, #tpu.memory_space<vmem>>, vector<128x128xbf16>
    %cst_11 = arith.constant dense<0.000000e+00> : vector<16x128xf32>
    %10 = tpu.matmul %8, %9, %cst_11 {dimension_numbers = #tpu.dot_dimension_numbers<[1], [0], [0], [1], [0, 0, 1, 1], [], []>} : vector<16x128xbf16>, vector<128x128xbf16>, vector<16x128xf32> -> vector<16x128xf32>
    %11 = arith.addf %7, %10 : vector<16x128xf32>
    %c1_12 = arith.constant 1 : index
    %c0_13 = arith.constant 0 : index
    %12 = vector.load %arg7[%c1_12, %c0_13] : memref<18x128xbf16, #tpu.memory_space<vmem>>, vector<16x128xbf16>
    %c128 = arith.constant 128 : index
    %c0_14 = arith.constant 0 : index
    %13 = vector.load %arg2[%c128, %c0_14] : memref<384x128xbf16, #tpu.memory_space<vmem>>, vector<128x128xbf16>
    %cst_15 = arith.constant dense<0.000000e+00> : vector<16x128xf32>
    %14 = tpu.matmul %12, %13, %cst_15 {dimension_numbers = #tpu.dot_dimension_numbers<[1], [0], [0], [1], [0, 0, 1, 1], [], []>} : vector<16x128xbf16>, vector<128x128xbf16>, vector<16x128xf32> -> vector<16x128xf32>
    %15 = arith.addf %11, %14 : vector<16x128xf32>
    %c2 = arith.constant 2 : index
    %c0_16 = arith.constant 0 : index
    %16 = vector.load %arg7[%c2, %c0_16] : memref<18x128xbf16, #tpu.memory_space<vmem>>, vector<16x128xbf16>
    %c256 = arith.constant 256 : index
    %c0_17 = arith.constant 0 : index
    %17 = vector.load %arg2[%c256, %c0_17] : memref<384x128xbf16, #tpu.memory_space<vmem>>, vector<128x128xbf16>
    %cst_18 = arith.constant dense<0.000000e+00> : vector<16x128xf32>
    %18 = tpu.matmul %16, %17, %cst_18 {dimension_numbers = #tpu.dot_dimension_numbers<[1], [0], [0], [1], [0, 0, 1, 1], [], []>} : vector<16x128xbf16>, vector<128x128xbf16>, vector<16x128xf32> -> vector<16x128xf32>
    %19 = arith.addf %15, %18 : vector<16x128xf32>
    %c0_19 = arith.constant 0 : index
    %c0_20 = arith.constant 0 : index
    %20 = vector.load %arg3[%c0_19, %c0_20] : memref<1x128xf32, #tpu.memory_space<vmem>>, vector<1x128xf32>
    %21 = vector.broadcast %20 : vector<1x128xf32> to vector<16x128xf32>
    %22 = arith.addf %19, %21 : vector<16x128xf32>
    %cst_21 = arith.constant 0.000000e+00 : f32
    %23 = vector.broadcast %cst_21 : f32 to vector<16x128xf32>
    %24 = arith.cmpf oge, %22, %23 : vector<16x128xf32>
    %cst_22 = arith.constant 0.00999999977 : f32
    %25 = vector.broadcast %cst_22 : f32 to vector<16x128xf32>
    %26 = arith.mulf %25, %22 : vector<16x128xf32>
    %27 = arith.select %24, %22, %26 : vector<16x128xi1>, vector<16x128xf32>
    %28 = arith.truncf %27 : vector<16x128xf32> to vector<16x128xbf16>
    %c1_23 = arith.constant 1 : index
    %c0_24 = arith.constant 0 : index
    %29 = vector.load %arg7[%c1_23, %c0_24] : memref<18x128xbf16, #tpu.memory_space<vmem>>, vector<16x128xbf16>
    tpu.vector_store %arg7[%c1_23, %c0_24], %28 {strides = array<i32>} : memref<18x128xbf16, #tpu.memory_space<vmem>>, vector<16x128xbf16>,
    %cst_25 = arith.constant 0.000000e+00 : f32
    %30 = vector.broadcast %cst_25 : f32 to vector<16x128xf32>
    %c0_26 = arith.constant 0 : index
    %c0_27 = arith.constant 0 : index
    %31 = vector.load %arg7[%c0_26, %c0_27] : memref<18x128xbf16, #tpu.memory_space<vmem>>, vector<16x128xbf16>
    %c0_28 = arith.constant 0 : index
    %c0_29 = arith.constant 0 : index
    %32 = vector.load %arg4[%c0_28, %c0_29] : memref<384x128xbf16, #tpu.memory_space<vmem>>, vector<128x128xbf16>
    %cst_30 = arith.constant dense<0.000000e+00> : vector<16x128xf32>
    %33 = tpu.matmul %31, %32, %cst_30 {dimension_numbers = #tpu.dot_dimension_numbers<[1], [0], [0], [1], [0, 0, 1, 1], [], []>} : vector<16x128xbf16>, vector<128x128xbf16>, vector<16x128xf32> -> vector<16x128xf32>
    %34 = arith.addf %30, %33 : vector<16x128xf32>
    %c1_31 = arith.constant 1 : index
    %c0_32 = arith.constant 0 : index
    %35 = vector.load %arg7[%c1_31, %c0_32] : memref<18x128xbf16, #tpu.memory_space<vmem>>, vector<16x128xbf16>
    %c128_33 = arith.constant 128 : index
    %c0_34 = arith.constant 0 : index
    %36 = vector.load %arg4[%c128_33, %c0_34] : memref<384x128xbf16, #tpu.memory_space<vmem>>, vector<128x128xbf16>
    %cst_35 = arith.constant dense<0.000000e+00> : vector<16x128xf32>
    %37 = tpu.matmul %35, %36, %cst_35 {dimension_numbers = #tpu.dot_dimension_numbers<[1], [0], [0], [1], [0, 0, 1, 1], [], []>} : vector<16x128xbf16>, vector<128x128xbf16>, vector<16x128xf32> -> vector<16x128xf32>
    %38 = arith.addf %34, %37 : vector<16x128xf32>
    %c2_36 = arith.constant 2 : index
    %c0_37 = arith.constant 0 : index
    %39 = vector.load %arg7[%c2_36, %c0_37] : memref<18x128xbf16, #tpu.memory_space<vmem>>, vector<16x128xbf16>
    %c256_38 = arith.constant 256 : index
    %c0_39 = arith.constant 0 : index
    %40 = vector.load %arg4[%c256_38, %c0_39] : memref<384x128xbf16, #tpu.memory_space<vmem>>, vector<128x128xbf16>
    %cst_40 = arith.constant dense<0.000000e+00> : vector<16x128xf32>
    %41 = tpu.matmul %39, %40, %cst_40 {dimension_numbers = #tpu.dot_dimension_numbers<[1], [0], [0], [1], [0, 0, 1, 1], [], []>} : vector<16x128xbf16>, vector<128x128xbf16>, vector<16x128xf32> -> vector<16x128xf32>
    %42 = arith.addf %38, %41 : vector<16x128xf32>
    %c0_41 = arith.constant 0 : index
    %c0_42 = arith.constant 0 : index
    %43 = vector.load %arg5[%c0_41, %c0_42] : memref<1x128xf32, #tpu.memory_space<vmem>>, vector<1x128xf32>
    %44 = vector.broadcast %43 : vector<1x128xf32> to vector<16x128xf32>
    %45 = arith.addf %42, %44 : vector<16x128xf32>
    %c0_43 = arith.constant 0 : index
    %c0_44 = arith.constant 0 : index
    %c0_45 = arith.constant 0 : index
    %46 = vector.load %arg1[%c0_43, %c0_44, %c0_45] : memref<1x16x128xf32, #tpu.memory_space<vmem>>, vector<1x16x128xf32>
    %47 = vector.shape_cast %46 : vector<1x16x128xf32> to vector<16x128xf32>
    %48 = arith.addf %47, %45 : vector<16x128xf32>
    %c0_46 = arith.constant 0 : index
    %c0_47 = arith.constant 0 : index
    %c0_48 = arith.constant 0 : index
    %49 = vector.load %arg6[%c0_46, %c0_47, %c0_48] : memref<1x16x128xf32, #tpu.memory_space<vmem>>, vector<1x16x128xf32>
    %50 = vector.shape_cast %49 : vector<1x16x128xf32> to vector<16x128xf32>
    %51 = vector.shape_cast %48 : vector<16x128xf32> to vector<1x16x128xf32>
    tpu.vector_store %arg6[%c0_46, %c0_47, %c0_48], %51 {strides = array<i32>} : memref<1x16x128xf32, #tpu.memory_space<vmem>>, vector<1x16x128xf32>,
    return
  }
  func.func @transform_0(%arg0: i32) -> (i32, i32, i32) {
    %c0_i32 = arith.constant 0 : i32
    %c0_i32_0 = arith.constant 0 : i32
    %c0_i32_1 = arith.constant 0 : i32
    return %arg0, %c0_i32, %c0_i32_0 : i32, i32, i32
  }
  func.func @transform_1(%arg0: i32) -> (i32, i32) {
    %c0_i32 = arith.constant 0 : i32
    %c0_i32_0 = arith.constant 0 : i32
    %c0_i32_1 = arith.constant 0 : i32
    return %c0_i32, %c0_i32_0 : i32, i32
  }
  func.func @transform_2(%arg0: i32) -> (i32, i32) {
    %c0_i32 = arith.constant 0 : i32
    %c0_i32_0 = arith.constant 0 : i32
    %c0_i32_1 = arith.constant 0 : i32
    return %c0_i32, %c0_i32_0 : i32, i32
  }
  func.func @transform_3(%arg0: i32) -> (i32, i32) {
    %c0_i32 = arith.constant 0 : i32
    %c0_i32_0 = arith.constant 0 : i32
    %c0_i32_1 = arith.constant 0 : i32
    return %c0_i32, %c0_i32_0 : i32, i32
  }
  func.func @transform_4(%arg0: i32) -> (i32, i32) {
    %c0_i32 = arith.constant 0 : i32
    %c0_i32_0 = arith.constant 0 : i32
    %c0_i32_1 = arith.constant 0 : i32
    return %c0_i32, %c0_i32_0 : i32, i32
  }
  func.func @transform_5(%arg0: i32) -> (i32, i32, i32) {
    %c0_i32 = arith.constant 0 : i32
    %c0_i32_0 = arith.constant 0 : i32
    %c0_i32_1 = arith.constant 0 : i32
    return %arg0, %c0_i32, %c0_i32_0 : i32, i32, i32
  }
}

</mosaic_0001>

<llo_original>
// kernel: tpu_custom_call.1
$region0: #{tpu_custom_call.1}
  #allocation0 [shape = 'u32[]', space=smem, size = 0x4, offset = 0x4, fixed_abs, tag = 'smem constant byte address 0x4 - core index']
  #allocation1 [shape = 'u32[144,128]{1,0:T(1,128)}', space=vmem, size = 0x12000, scoped, tag = 'internal scratch']
  #allocation2 [shape = 'bf16[18,128]{1,0:T(8,128)(2,1)}', space=vmem, size = 0x1800, scoped, tag = 'scratch operand']
  %s0 = inlined_call_operand.hbm [shape: f32[2,16,128], index: 0, kind: input, shape index: {}]
  %s1 = inlined_call_operand.hbm [shape: bf16[384,128], index: 1, kind: input, shape index: {}]
  %s2 = inlined_call_operand.vmem [shape: f32[1,128], index: 2, kind: input, shape index: {}]
  %s3 = inlined_call_operand.hbm [shape: bf16[384,128], index: 3, kind: input, shape index: {}]
  %s4 = inlined_call_operand.vmem [shape: f32[1,128], index: 4, kind: input, shape index: {}]
  %s5 = inlined_call_operand.hbm [shape: f32[2,16,128], index: 5, kind: output, shape index: {}]
  %s6 = sld [smem:[#allocation0]]
  $region65: #{tpu_custom_call.1} parent=0
    _
  %s8 = ssub.s32 1, %s6
  %s9 = scalar_select 0, %s8, %s6
  $region1: #{tpu_custom_call.1} parent=0
    #allocation3 [shape = 'u8[16384]{0}', space=vmem, size = 0x4000, scoped, tag = 'input window, operand 0']
    #allocation4 [shape = 's32[2]{0}', space=sflag, size = 0x8, scoped, tag = 'scoped memory for tpu_custom_call.1']
    #allocation5 [shape = 's32[2]{0}', space=sflag, size = 0x8, scoped, tag = 'scoped memory for tpu_custom_call.1']
    #allocation6 [shape = 'u8[98304]{0}', space=vmem, size = 0x18000, scoped, tag = 'input window, operand 1, single buffered']
    #allocation7 [shape = 's32[1]{0}', space=sflag, size = 0x4, scoped, tag = 'scoped memory for tpu_custom_call.1']
    #allocation8 [shape = 'u8[98304]{0}', space=vmem, size = 0x18000, scoped, tag = 'input window, operand 3, single buffered']
    #allocation9 [shape = 'u8[16384]{0}', space=vmem, size = 0x4000, scoped, tag = 'output window, operand 0']
    %10 = vsyncpa [#allocation4], 0
    %s11 = scalar_lea.sflag [#allocation4], 1
    %12 = vsyncpa %s11, 0
    %13 = vsyncpa [#allocation7], 0
    %14 = vsyncpa [#allocation5], 0
    %s15 = scalar_lea.sflag [#allocation5], 1
    %16 = vsyncpa %s15, 0
    loop: start=0, step=1, limit=4
    $region2: #{tpu_custom_call.1} parent=1 // loop_pre_header
      _
    $region3: #{tpu_custom_call.1} parent=1 // loop_header
      %s18 = sphi 0, %s22
      %p19 = scmp.ge.s32.totalorder %s18, 4
      %s28 = sphi 0, %s30
      %s31 = sphi 0, %s28
      %s32 = sphi 0, %s31
      %s48 = sphi 0, %s32
      %s52 = sphi 0, %s52
      %s54 = sphi 0, %s52
      %s55 = sphi 0, %s54
      %s69 = sphi 0, %s55
      %s73 = sphi 0, %s73
      %s75 = sphi 0, %s73
      %s76 = sphi 0, %s75
      %s90 = sphi 0, %s76
      %s94 = sphi 0, %s94
      %s96 = sphi 0, %s94
      %s97 = sphi 0, %s96
      %s111 = sphi 0, %s97
      %s115 = sphi 0, %s115
      %s117 = sphi 0, %s115
      %s118 = sphi 0, %s117
      %s132 = sphi 0, %s118
      %s138 = sphi 0, %s140
      %s141 = sphi 0, %s138
      %s142 = sphi 0, %s141
      %s158 = sphi 0, %s142
    $region4: #{tpu_custom_call.1} parent=1 // loop_header_branch
      %21 = sbr.rel (%p19) target = $region8
    $region5: #{tpu_custom_call.1} parent=1 // loop_body
      %s23 = ssub.s32 %s18, 1
      %s24 = ssub.s32 %s18, 2
      %s25 = sadd.s32 %s18, 1
      %s26 = ssub.s32 %s18, %s25
      %p27 = scmp.eq.s32.totalorder %s26, 0
      %s29 = sadd.s32 %s28, 1
      %s30 = scalar_select %p27, %s28, %s29
      %p33 = pneg %p27
      %p34 = scmp.eq.s32.totalorder %s18, 1
      %p35 = por %p33, %p34
      %p36 = scmp.ne.s32.totalorder %s28, %s31
      %p37 = scmp.eq.s32.totalorder %s18, 0
      %p38 = por %p36, %p37
      %p39 = scmp.ne.s32.totalorder %s28, %s31
      %p40 = scmp.eq.s32.totalorder %s23, 1
      %p41 = por %p39, %p40
      %p42 = scmp.ne.s32.totalorder %s31, %s32
      %p43 = scmp.eq.s32.totalorder %s23, 0
      %p44 = por %p42, %p43
      %p45 = scmp.ne.s32.totalorder %s31, %s32
      %p46 = scmp.eq.s32.totalorder %s24, 1
      %p47 = por %p45, %p46
      %p49 = scmp.ne.s32.totalorder %s32, %s48
      %p50 = scmp.eq.s32.totalorder %s24, 0
      %p51 = por %p49, %p50
      %s53 = sadd.s32 %s52, 1
      %p56 = scmp.eq.s32.totalorder %s18, 1
      %p57 = scmp.ne.s32.totalorder %s52, %s54
      %p58 = scmp.eq.s32.totalorder %s18, 0
      %p59 = por %p57, %p58
      %p60 = scmp.ne.s32.totalorder %s52, %s54
      %p61 = scmp.eq.s32.totalorder %s23, 1
      %p62 = por %p60, %p61
      %p63 = scmp.ne.s32.totalorder %s54, %s55
      %p64 = scmp.eq.s32.totalorder %s23, 0
      %p65 = por %p63, %p64
      %p66 = scmp.ne.s32.totalorder %s54, %s55
      %p67 = scmp.eq.s32.totalorder %s24, 1
      %p68 = por %p66, %p67
      %p70 = scmp.ne.s32.totalorder %s55, %s69
      %p71 = scmp.eq.s32.totalorder %s24, 0
      %p72 = por %p70, %p71
      %s74 = sadd.s32 %s73, 1
      %p77 = scmp.eq.s32.totalorder %s18, 1
      %p78 = scmp.ne.s32.totalorder %s73, %s75
      %p79 = scmp.eq.s32.totalorder %s18, 0
      %p80 = por %p78, %p79
      %p81 = scmp.ne.s32.totalorder %s73, %s75
      %p82 = scmp.eq.s32.totalorder %s23, 1
      %p83 = por %p81, %p82
      %p84 = scmp.ne.s32.totalorder %s75, %s76
      %p85 = scmp.eq.s32.totalorder %s23, 0
      %p86 = por %p84, %p85
      %p87 = scmp.ne.s32.totalorder %s75, %s76
      %p88 = scmp.eq.s32.totalorder %s24, 1
      %p89 = por %p87, %p88
      %p91 = scmp.ne.s32.totalorder %s76, %s90
      %p92 = scmp.eq.s32.totalorder %s24, 0
      %p93 = por %p91, %p92
      %s95 = sadd.s32 %s94, 1
      %p98 = scmp.eq.s32.totalorder %s18, 1
      %p99 = scmp.ne.s32.totalorder %s94, %s96
      %p100 = scmp.eq.s32.totalorder %s18, 0
      %p101 = por %p99, %p100
      %p102 = scmp.ne.s32.totalorder %s94, %s96
      %p103 = scmp.eq.s32.totalorder %s23, 1
      %p104 = por %p102, %p103
      %p105 = scmp.ne.s32.totalorder %s96, %s97
      %p106 = scmp.eq.s32.totalorder %s23, 0
      %p107 = por %p105, %p106
      %p108 = scmp.ne.s32.totalorder %s96, %s97
      %p109 = scmp.eq.s32.totalorder %s24, 1
      %p110 = por %p108, %p109
      %p112 = scmp.ne.s32.totalorder %s97, %s111
      %p113 = scmp.eq.s32.totalorder %s24, 0
      %p114 = por %p112, %p113
      %s116 = sadd.s32 %s115, 1
      %p119 = scmp.eq.s32.totalorder %s18, 1
      %p120 = scmp.ne.s32.totalorder %s115, %s117
      %p121 = scmp.eq.s32.totalorder %s18, 0
      %p122 = por %p120, %p121
      %p123 = scmp.ne.s32.totalorder %s115, %s117
      %p124 = scmp.eq.s32.totalorder %s23, 1
      %p125 = por %p123, %p124
      %p126 = scmp.ne.s32.totalorder %s117, %s118
      %p127 = scmp.eq.s32.totalorder %s23, 0
      %p128 = por %p126, %p127
      %p129 = scmp.ne.s32.totalorder %s117, %s118
      %p130 = scmp.eq.s32.totalorder %s24, 1
      %p131 = por %p129, %p130
      %p133 = scmp.ne.s32.totalorder %s118, %s132
      %p134 = scmp.eq.s32.totalorder %s24, 0
      %p135 = por %p133, %p134
      %s136 = ssub.s32 %s18, %s25
      %p137 = scmp.eq.s32.totalorder %s136, 0
      %s139 = sadd.s32 %s138, 1
      %s140 = scalar_select %p137, %s138, %s139
      %p143 = pneg %p137
      %p144 = scmp.eq.s32.totalorder %s18, 1
      %p145 = por %p143, %p144
      %p146 = scmp.ne.s32.totalorder %s138, %s141
      %p147 = scmp.eq.s32.totalorder %s18, 0
      %p148 = por %p146, %p147
      %p149 = scmp.ne.s32.totalorder %s138, %s141
      %p150 = scmp.eq.s32.totalorder %s23, 1
      %p151 = por %p149, %p150
      %p152 = scmp.ne.s32.totalorder %s141, %s142
      %p153 = scmp.eq.s32.totalorder %s23, 0
      %p154 = por %p152, %p153
      %p155 = scmp.ne.s32.totalorder %s141, %s142
      %p156 = scmp.eq.s32.totalorder %s24, 1
      %p157 = por %p155, %p156
      %p159 = scmp.ne.s32.totalorder %s142, %s158
      %p160 = scmp.eq.s32.totalorder %s24, 0
      %p161 = por %p159, %p160
      %p162 = scmp.le.s32.totalorder 1, %s18
      %p163 = scmp.lt.s32.totalorder %s18, 3
      %p164 = pnand %p162, %p163
      %p165 = pneg %p164
      // Predicated region
      $region9: #{tpu_custom_call.1} parent=5 // pred_check
        _
      $region10: #{tpu_custom_call.1} parent=5 // pred_check_branch
        %167 = sbr.rel (%p164) target = $region12
      $region11: #{tpu_custom_call.1} parent=5 // pred_region
        %s168 = ssub.s32 %s18, 1
        // Predicated region
        $region13: #{tpu_custom_call.1} parent=11 // pred_check
          %p169 = pneg %p65
        $region14: #{tpu_custom_call.1} parent=11 // pred_check_branch
          %171 = sbr.rel (%p169) target = $region16
        $region15: #{tpu_custom_call.1} parent=11 // pred_region
          %s173 = ssub.s32 3072, 3072
          %174 = vsyncadd [#allocation7], %s173
          %s175 = sshll.u32 [#allocation6], 4
          %s176 = int_to_ptr.vmem [resolvable:$true] %s175
          %181 = dma.hbm_to_vmem [thread:$0]  %s1, 3072, %s176, [#allocation7], 64, 64, 4
        $region16: #{tpu_custom_call.1} parent=11 // pred_fallthru
          _
        // Predicated region
        $region17: #{tpu_custom_call.1} parent=11 // pred_check
          %p182 = pneg %p86
        $region18: #{tpu_custom_call.1} parent=11 // pred_check_branch
          %184 = sbr.rel (%p182) target = $region20
        $region19: #{tpu_custom_call.1} parent=11 // pred_region
          _
        $region20: #{tpu_custom_call.1} parent=11 // pred_fallthru
          _
        // Predicated region
        $region21: #{tpu_custom_call.1} parent=11 // pred_check
          %p185 = pneg %p107
        $region22: #{tpu_custom_call.1} parent=11 // pred_check_branch
          %187 = sbr.rel (%p185) target = $region24
        $region23: #{tpu_custom_call.1} parent=11 // pred_region
          %s189 = ssub.s32 3072, 3072
          %190 = vsyncadd [#allocation7], %s189
          %s191 = sshll.u32 [#allocation8], 4
          %s192 = int_to_ptr.vmem [resolvable:$true] %s191
          %197 = dma.hbm_to_vmem [thread:$0]  %s3, 3072, %s192, [#allocation7], 64, 64, 4
        $region24: #{tpu_custom_call.1} parent=11 // pred_fallthru
          _
        // Predicated region
        $region25: #{tpu_custom_call.1} parent=11 // pred_check
          %p198 = pneg %p128
        $region26: #{tpu_custom_call.1} parent=11 // pred_check_branch
          %200 = sbr.rel (%p198) target = $region28
        $region27: #{tpu_custom_call.1} parent=11 // pred_region
          _
        $region28: #{tpu_custom_call.1} parent=11 // pred_fallthru
          _
      $region12: #{tpu_custom_call.1} parent=5 // pred_fallthru
        _
      %p201 = scmp.lt.s32.totalorder %s18, 2
      // Predicated region
      $region29: #{tpu_custom_call.1} parent=5 // pred_check
        %p202 = pneg %p201
      $region30: #{tpu_custom_call.1} parent=5 // pred_check_branch
        %204 = sbr.rel (%p202) target = $region32
      $region31: #{tpu_custom_call.1} parent=5 // pred_region
        // Predicated region
        $region33: #{tpu_custom_call.1} parent=31 // pred_check
          %p205 = pneg %p38
        $region34: #{tpu_custom_call.1} parent=31 // pred_check_branch
          %207 = sbr.rel (%p205) target = $region36
        $region35: #{tpu_custom_call.1} parent=31 // pred_region
          %s208 = sand.u32 %s28, 1
          %s209 = scalar_lea.sflag [#allocation4], %s208
          %s210 = sand.u32 %s28, 1
          %s211 = smul.addr %s210, 16
          %s212 = scalar_lea.vmem [#allocation3], %s211
          %s214 = ssub.s32 256, 256
          %215 = vsyncadd %s209, %s214
          %s216 = smul.addr %s18, 2
          %s217 = smul.addr %s216, 128
          %s218 = scalar_lea.hbm %s0, %s217
          %s219 = sshll.u32 %s212, 4
          %s220 = int_to_ptr.vmem [resolvable:$true] %s219
          %225 = dma.hbm_to_vmem [thread:$0]  %s218, 256, %s220, %s209, 128, 128, 8
        $region36: #{tpu_custom_call.1} parent=31 // pred_fallthru
          _
      $region32: #{tpu_custom_call.1} parent=5 // pred_fallthru
        _
      %p226 = scmp.le.s32.totalorder 1, %s18
      %p227 = scmp.lt.s32.totalorder %s18, 3
      %p228 = pnand %p226, %p227
      %p229 = pneg %p228
      // Predicated region
      $region37: #{tpu_custom_call.1} parent=5 // pred_check
        _
      $region38: #{tpu_custom_call.1} parent=5 // pred_check_branch
        %231 = sbr.rel (%p228) target = $region40
      $region39: #{tpu_custom_call.1} parent=5 // pred_region
        %s232 = ssub.s32 %s18, 1
        %s233 = sand.u32 %s31, 1
        %s234 = scalar_lea.sflag [#allocation4], %s233
        %s235 = sand.u32 %s31, 1
        %s236 = smul.addr %s235, 16
        %s237 = scalar_lea.vmem [#allocation3], %s236
        // Predicated region
        $region41: #{tpu_custom_call.1} parent=39 // pred_check
          %p238 = pneg %p44
        $region42: #{tpu_custom_call.1} parent=39 // pred_check_branch
          %240 = sbr.rel (%p238) target = $region44
        $region43: #{tpu_custom_call.1} parent=39 // pred_region
          %241 = dma.done %s234, 256
        $region44: #{tpu_custom_call.1} parent=39 // pred_fallthru
          _
        // Predicated region
        $region45: #{tpu_custom_call.1} parent=39 // pred_check
          %p242 = pneg %p65
        $region46: #{tpu_custom_call.1} parent=39 // pred_check_branch
          %244 = sbr.rel (%p242) target = $region48
        $region47: #{tpu_custom_call.1} parent=39 // pred_region
          %245 = dma.done [#allocation7], 3072
        $region48: #{tpu_custom_call.1} parent=39 // pred_fallthru
          _
        // Predicated region
        $region49: #{tpu_custom_call.1} parent=39 // pred_check
          %p246 = pneg %p107
        $region50: #{tpu_custom_call.1} parent=39 // pred_check_branch
          %248 = sbr.rel (%p246) target = $region52
        $region51: #{tpu_custom_call.1} parent=39 // pred_region
          %249 = dma.done [#allocation7], 3072
        $region52: #{tpu_custom_call.1} parent=39 // pred_fallthru
          _
        %s250 = sand.u32 %s31, 1
        %s251 = scalar_lea.sflag [#allocation4], %s250
        %s252 = sand.u32 %s31, 1
        %s253 = smul.addr %s252, 16
        %s254 = scalar_lea.vmem [#allocation3], %s253
        %p255 = pneg %p44
        %p256 = pneg %p41
        %p257 = pneg %p65
        %p258 = pneg %p62
        %p259 = pneg %p86
        %p260 = pneg %p83
        %p261 = pneg %p107
        %p262 = pneg %p104
        %p263 = pneg %p128
        %p264 = pneg %p125
        %p265 = pneg %p154
        %p266 = pneg %p151
        %s267 = sand.u32 %s141, 1
        %s268 = scalar_lea.sflag [#allocation5], %s267
        %s269 = sand.u32 %s141, 1
        %s270 = smul.addr %s269, 16
        %s271 = scalar_lea.vmem [#allocation9], %s270
        %vm273 = vcmask 1040384
        %vm274 = vsmask.f32 256
        %vm275 = vmand %vm273, %vm274
        %v276 = vld [vmem:[#allocation2] sm:$0x1]
        %v277 = vsel %vm275, 0, %v276
        %278 = vst [vmem:[#allocation2] sm:$0x1] %v277
        %vm279 = vsmask.f32 7938
        %vm280 = vmand %vm273, %vm279
        %v281 = vld [vmem:[#allocation2 + $0x8] sm:$0x1]
        %v282 = vsel %vm280, 0, %v281
        %283 = vst [vmem:[#allocation2 + $0x8] sm:$0x1] %v282
        %v284 = vld [vmem:[%s237] sm:$0xff]
        %v285 = vld [vmem:[%s237 + $0x8] sm:$0xff]
        %v286 = vpack.c.bf16 %v285, %v284
        %v288 = vunpack.c.l.b16 %v286
        %v289 = vunpack.c.h.b16 %v286
        %v290 = vpack.c.b16 %v288, %v288
        %v291 = vpack.c.b16 %v289, %v289
        %vm292 = vsmask.f32 4368
        %vm293 = vmor %vm274, %vm292
        %v295 = vshrl.u32 %v290, 16
        %v297 = vrot.slane %v295, 7
        %v298 = vshll.u32 %v290, 16
        %v300 = vor.u32 %v297, %v298
        %v301 = vrot.slane %v297, 4
        %v303 = vshrl.u32 %v291, 16
        %v305 = vrot.slane %v303, 7
        %v306 = vshll.u32 %v291, 16
        %v308 = vor.u32 %v305, %v306
        %v309 = vsel %vm293, %v301, %v308
        %v310 = vrot.slane %v305, 4
        %vm314 = vcmask 1043456
        %vm315 = vmand %vm314, %vm279
        %v316 = vld [vmem:[#allocation2] sm:$0xf]
        %v317 = vsel %vm315, %v300, %v316
        %318 = vst [vmem:[#allocation2] sm:$0xf] %v317
        %319 = vst [vmem:[#allocation2 + $0x4] sm:$0xf] %v309
        %v320 = vld [vmem:[#allocation2 + $0x8] sm:$0x1]
        %v321 = vsel %vm275, %v310, %v320
        %322 = vst [vmem:[#allocation2 + $0x8] sm:$0x1] %v321
        %v323 = vld [vmem:[#allocation2] sm:$0xf]
        %v324 = vld [vmem:[#allocation2 + $0x4] sm:$0xf]
        %v325 = vld [vmem:[#allocation6] sm:$0xf]
        %v326 = vld [vmem:[#allocation6 + $0x4] sm:$0xf]
        %v327 = vld [vmem:[#allocation6 + $0x8] sm:$0xf]
        %v328 = vld [vmem:[#allocation6 + $0xc] sm:$0xf]
        %v329 = vld [vmem:[#allocation6 + $0x10] sm:$0xf]
        %v330 = vld [vmem:[#allocation6 + $0x14] sm:$0xf]
        %v331 = vld [vmem:[#allocation6 + $0x18] sm:$0xf]
        %v332 = vld [vmem:[#allocation6 + $0x1c] sm:$0xf]
        %v333 = vld [vmem:[#allocation6 + $0x20] sm:$0xf]
        %v334 = vld [vmem:[#allocation6 + $0x24] sm:$0xf]
        %v335 = vld [vmem:[#allocation6 + $0x28] sm:$0xf]
        %v336 = vld [vmem:[#allocation6 + $0x2c] sm:$0xf]
        %v337 = vld [vmem:[#allocation6 + $0x30] sm:$0xf]
        %v338 = vld [vmem:[#allocation6 + $0x34] sm:$0xf]
        %v339 = vld [vmem:[#allocation6 + $0x38] sm:$0xf]
        %v340 = vld [vmem:[#allocation6 + $0x3c] sm:$0xf]
        %v341 = vld [vmem:[#allocation2 + $0x8] sm:$0x1]
        %v342 = vld [vmem:[#allocation6 + $0x40] sm:$0xf]
        %v343 = vld [vmem:[#allocation6 + $0x44] sm:$0xf]
        %v344 = vld [vmem:[#allocation6 + $0x48] sm:$0xf]
        %v345 = vld [vmem:[#allocation6 + $0x4c] sm:$0xf]
        %v346 = vld [vmem:[#allocation6 + $0x50] sm:$0xf]
        %v347 = vld [vmem:[#allocation6 + $0x54] sm:$0xf]
        %v348 = vld [vmem:[#allocation6 + $0x58] sm:$0xf]
        %v349 = vld [vmem:[#allocation6 + $0x5c] sm:$0xf]
        %v350 = vld [vmem:[#allocation6 + $0x60] sm:$0xf]
        %v351 = vld [vmem:[#allocation6 + $0x64] sm:$0xf]
        %v352 = vld [vmem:[#allocation6 + $0x68] sm:$0xf]
        %v353 = vld [vmem:[#allocation6 + $0x6c] sm:$0xf]
        %v354 = vld [vmem:[#allocation6 + $0x70] sm:$0xf]
        %v355 = vld [vmem:[#allocation6 + $0x74] sm:$0xf]
        %v356 = vld [vmem:[#allocation6 + $0x78] sm:$0xf]
        %v357 = vld [vmem:[#allocation6 + $0x7c] sm:$0xf]
        %v361 = vunpack.c.l.b16 %v323
        %v362 = vunpack.c.l.b16 %v324
        %v363 = vunpack.c.l.b16 %v341
        %v364 = vpack.c.b16 %v362, %v361
        %v365 = vpack.c.b16 %v363, %v363
        %vm366 = vsmask.f32 7424
        %v368 = vshrl.u32 %v364, 16
        %v370 = vshll.u32 %v364, 16
        %v372 = vrot.slane %v370, 1
        %v373 = vor.u32 %v368, %v372
        %v375 = vshll.u32 %v365, 16
        %v377 = vrot.slane %v375, 1
        %v378 = vsel %vm366, %v373, %v377
        %v396 = vunpack.c.l.b16 %v342
        %v397 = vunpack.c.l.b16 %v343
        %v398 = vunpack.c.l.b16 %v344
        %v399 = vunpack.c.l.b16 %v345
        %v400 = vunpack.c.l.b16 %v346
        %v401 = vunpack.c.l.b16 %v347
        %v402 = vunpack.c.l.b16 %v348
        %v403 = vunpack.c.l.b16 %v349
        %v404 = vunpack.c.l.b16 %v350
        %v405 = vunpack.c.l.b16 %v351
        %v406 = vunpack.c.l.b16 %v352
        %v407 = vunpack.c.l.b16 %v353
        %v408 = vunpack.c.l.b16 %v354
        %v409 = vunpack.c.l.b16 %v355
        %v410 = vunpack.c.l.b16 %v356
        %v411 = vunpack.c.l.b16 %v357
        %v412 = vpack.c.b16 %v397, %v396
        %v413 = vpack.c.b16 %v399, %v398
        %v414 = vpack.c.b16 %v401, %v400
        %v415 = vpack.c.b16 %v403, %v402
        %v416 = vpack.c.b16 %v405, %v404
        %v417 = vpack.c.b16 %v407, %v406
        %v418 = vpack.c.b16 %v409, %v408
        %v419 = vpack.c.b16 %v411, %v410
        %428 = vmatprep.subr.bf16.mxu0 0
        %429 = vmatpush1.bf16.msra.mxu0 %v412
        %430 = vmatprep.subr.bf16.mxu0 0
        %431 = vmatpush1.bf16.msra.mxu0 %v413
        %432 = vmatprep.subr.bf16.mxu0 0
        %433 = vmatpush1.bf16.msra.mxu0 %v414
        %434 = vmatprep.subr.bf16.mxu0 0
        %435 = vmatpush1.bf16.msra.mxu0 %v415
        %436 = vmatprep.subr.bf16.mxu0 0
        %437 = vmatpush1.bf16.msra.mxu0 %v416
        %438 = vmatprep.subr.bf16.mxu0 0
        %439 = vmatpush1.bf16.msra.mxu0 %v417
        %440 = vmatprep.subr.bf16.mxu0 0
        %441 = vmatpush1.bf16.msra.mxu0 %v418
        %442 = vmatprep.subr.bf16.mxu0 0
        %443 = vmatpush1.bf16.msra.mxu0 %v419
        %444 = vmatprep.subr.bf16.mxu0 0
        %445 = vmatpush1.bf16.msra.mxu0 0
        %446 = vmatprep.subr.bf16.mxu0 0
        %447 = vmatpush1.bf16.msra.mxu0 0
        %448 = vmatprep.subr.bf16.mxu0 0
        %449 = vmatpush1.bf16.msra.mxu0 0
        %450 = vmatprep.subr.bf16.mxu0 0
        %451 = vmatpush1.bf16.msra.mxu0 0
        %452 = vmatprep.subr.bf16.mxu0 0
        %453 = vmatpush1.bf16.msra.mxu0 0
        %454 = vmatprep.subr.bf16.mxu0 0
        %455 = vmatpush1.bf16.msra.mxu0 0
        %456 = vmatprep.subr.bf16.mxu0 0
        %457 = vmatpush1.bf16.msra.mxu0 0
        %458 = vmatprep.subr.bf16.mxu0 0
        %459 = vmatpush1.bf16.msra.mxu0 0
        %460 = vmatprep.mubr.bf16.mxu0 0
        %461 = vmatmul.mubr.bf16.gmra.mrb[0].mxu0 %v378
        %v462 = vpop.f32.mrb[0].mxu0
        %v463 = vadd.f32 0.0, %v462
        %v464 = vpop.f32.mrb[0].mxu0
        %v465 = vpop.f32.mrb[0].mxu0
        %v466 = vadd.f32 0.0, %v465
        %v467 = vpop.f32.mrb[0].mxu0
        %468 = vdwg.mxu0
        %v486 = vunpack.c.l.b16 %v325
        %v487 = vunpack.c.l.b16 %v326
        %v488 = vunpack.c.l.b16 %v327
        %v489 = vunpack.c.l.b16 %v328
        %v490 = vunpack.c.l.b16 %v329
        %v491 = vunpack.c.l.b16 %v330
        %v492 = vunpack.c.l.b16 %v331
        %v493 = vunpack.c.l.b16 %v332
        %v494 = vunpack.c.l.b16 %v333
        %v495 = vunpack.c.l.b16 %v334
        %v496 = vunpack.c.l.b16 %v335
        %v497 = vunpack.c.l.b16 %v336
        %v498 = vunpack.c.l.b16 %v337
        %v499 = vunpack.c.l.b16 %v338
        %v500 = vunpack.c.l.b16 %v339
        %v501 = vunpack.c.l.b16 %v340
        %v502 = vpack.c.b16 %v487, %v486
        %v503 = vpack.c.b16 %v489, %v488
        %v504 = vpack.c.b16 %v491, %v490
        %v505 = vpack.c.b16 %v493, %v492
        %v506 = vpack.c.b16 %v495, %v494
        %v507 = vpack.c.b16 %v497, %v496
        %v508 = vpack.c.b16 %v499, %v498
        %v509 = vpack.c.b16 %v501, %v500
        %518 = vmatprep.subr.bf16.mxu0 0
        %519 = vmatpush1.bf16.msra.mxu0 %v502
        %520 = vmatprep.subr.bf16.mxu0 0
        %521 = vmatpush1.bf16.msra.mxu0 %v503
        %522 = vmatprep.subr.bf16.mxu0 0
        %523 = vmatpush1.bf16.msra.mxu0 %v504
        %524 = vmatprep.subr.bf16.mxu0 0
        %525 = vmatpush1.bf16.msra.mxu0 %v505
        %526 = vmatprep.subr.bf16.mxu0 0
        %527 = vmatpush1.bf16.msra.mxu0 %v506
        %528 = vmatprep.subr.bf16.mxu0 0
        %529 = vmatpush1.bf16.msra.mxu0 %v507
        %530 = vmatprep.subr.bf16.mxu0 0
        %531 = vmatpush1.bf16.msra.mxu0 %v508
        %532 = vmatprep.subr.bf16.mxu0 0
        %533 = vmatpush1.bf16.msra.mxu0 %v509
        %534 = vmatprep.subr.bf16.mxu0 0
        %535 = vmatpush1.bf16.msra.mxu0 0
        %536 = vmatprep.subr.bf16.mxu0 0
        %537 = vmatpush1.bf16.msra.mxu0 0
        %538 = vmatprep.subr.bf16.mxu0 0
        %539 = vmatpush1.bf16.msra.mxu0 0
        %540 = vmatprep.subr.bf16.mxu0 0
        %541 = vmatpush1.bf16.msra.mxu0 0
        %542 = vmatprep.subr.bf16.mxu0 0
        %543 = vmatpush1.bf16.msra.mxu0 0
        %544 = vmatprep.subr.bf16.mxu0 0
        %545 = vmatpush1.bf16.msra.mxu0 0
        %546 = vmatprep.subr.bf16.mxu0 0
        %547 = vmatpush1.bf16.msra.mxu0 0
        %548 = vmatprep.subr.bf16.mxu0 0
        %549 = vmatpush1.bf16.msra.mxu0 0
        %550 = vmatprep.mubr.bf16.mxu0 0
        %551 = vmatmul.mubr.bf16.gmra.mrb[0].mxu0 %v364
        %v552 = vpop.f32.mrb[0].mxu0
        %v553 = vadd.f32 %v463, %v552
        %v554 = vpop.f32.mrb[0].mxu0
        %v555 = vpop.f32.mrb[0].mxu0
        %v556 = vadd.f32 %v466, %v555
        %v557 = vpop.f32.mrb[0].mxu0
        %558 = vdwg.mxu0
        %v559 = vld [vmem:[#allocation2] sm:$0xe]
        %v560 = vld [vmem:[#allocation6 + $0x80] sm:$0xf]
        %v561 = vld [vmem:[#allocation6 + $0x84] sm:$0xf]
        %v562 = vld [vmem:[#allocation6 + $0x88] sm:$0xf]
        %v563 = vld [vmem:[#allocation6 + $0x8c] sm:$0xf]
        %v564 = vld [vmem:[#allocation6 + $0x90] sm:$0xf]
        %v565 = vld [vmem:[#allocation6 + $0x94] sm:$0xf]
        %v566 = vld [vmem:[#allocation6 + $0x98] sm:$0xf]
        %v567 = vld [vmem:[#allocation6 + $0x9c] sm:$0xf]
        %v568 = vld [vmem:[#allocation6 + $0xa0] sm:$0xf]
        %v569 = vld [vmem:[#allocation6 + $0xa4] sm:$0xf]
        %v570 = vld [vmem:[#allocation6 + $0xa8] sm:$0xf]
        %v571 = vld [vmem:[#allocation6 + $0xac] sm:$0xf]
        %v572 = vld [vmem:[#allocation6 + $0xb0] sm:$0xf]
        %v573 = vld [vmem:[#allocation6 + $0xb4] sm:$0xf]
        %v574 = vld [vmem:[#allocation6 + $0xb8] sm:$0xf]
        %v575 = vld [vmem:[#allocation6 + $0xbc] sm:$0xf]
        %v577 = vunpack.c.l.b16 %v559
        %v578 = vpack.c.b16 %v362, %v577
        %vm579 = vcmask 1046528
        %v580 = vrot.slane %v578, 1
        %v581 = vrot.slane %v365, 1
        %v582 = vsel %vm579, %v580, %v581
        %v600 = vunpack.c.l.b16 %v560
        %v601 = vunpack.c.l.b16 %v561
        %v602 = vunpack.c.l.b16 %v562
        %v603 = vunpack.c.l.b16 %v563
        %v604 = vunpack.c.l.b16 %v564
        %v605 = vunpack.c.l.b16 %v565
        %v606 = vunpack.c.l.b16 %v566
        %v607 = vunpack.c.l.b16 %v567
        %v608 = vunpack.c.l.b16 %v568
        %v609 = vunpack.c.l.b16 %v569
        %v610 = vunpack.c.l.b16 %v570
        %v611 = vunpack.c.l.b16 %v571
        %v612 = vunpack.c.l.b16 %v572
        %v613 = vunpack.c.l.b16 %v573
        %v614 = vunpack.c.l.b16 %v574
        %v615 = vunpack.c.l.b16 %v575
        %v616 = vpack.c.b16 %v601, %v600
        %v617 = vpack.c.b16 %v603, %v602
        %v618 = vpack.c.b16 %v605, %v604
        %v619 = vpack.c.b16 %v607, %v606
        %v620 = vpack.c.b16 %v609, %v608
        %v621 = vpack.c.b16 %v611, %v610
        %v622 = vpack.c.b16 %v613, %v612
        %v623 = vpack.c.b16 %v615, %v614
        %632 = vmatprep.subr.bf16.mxu0 0
        %633 = vmatpush1.bf16.msra.mxu0 %v616
        %634 = vmatprep.subr.bf16.mxu0 0
        %635 = vmatpush1.bf16.msra.mxu0 %v617
        %636 = vmatprep.subr.bf16.mxu0 0
        %637 = vmatpush1.bf16.msra.mxu0 %v618
        %638 = vmatprep.subr.bf16.mxu0 0
        %639 = vmatpush1.bf16.msra.mxu0 %v619
        %640 = vmatprep.subr.bf16.mxu0 0
        %641 = vmatpush1.bf16.msra.mxu0 %v620
        %642 = vmatprep.subr.bf16.mxu0 0
        %643 = vmatpush1.bf16.msra.mxu0 %v621
        %644 = vmatprep.subr.bf16.mxu0 0
        %645 = vmatpush1.bf16.msra.mxu0 %v622
        %646 = vmatprep.subr.bf16.mxu0 0
        %647 = vmatpush1.bf16.msra.mxu0 %v623
        %648 = vmatprep.subr.bf16.mxu0 0
        %649 = vmatpush1.bf16.msra.mxu0 0
        %650 = vmatprep.subr.bf16.mxu0 0
        %651 = vmatpush1.bf16.msra.mxu0 0
        %652 = vmatprep.subr.bf16.mxu0 0
        %653 = vmatpush1.bf16.msra.mxu0 0
        %654 = vmatprep.subr.bf16.mxu0 0
        %655 = vmatpush1.bf16.msra.mxu0 0
        %656 = vmatprep.subr.bf16.mxu0 0
        %657 = vmatpush1.bf16.msra.mxu0 0
        %658 = vmatprep.subr.bf16.mxu0 0
        %659 = vmatpush1.bf16.msra.mxu0 0
        %660 = vmatprep.subr.bf16.mxu0 0
        %661 = vmatpush1.bf16.msra.mxu0 0
        %662 = vmatprep.subr.bf16.mxu0 0
        %663 = vmatpush1.bf16.msra.mxu0 0
        %664 = vmatprep.mubr.bf16.mxu0 0
        %665 = vmatmul.mubr.bf16.gmra.mrb[0].mxu0 %v582
        %v666 = vpop.f32.mrb[0].mxu0
        %v667 = vadd.f32 0.0, %v666
        %v668 = vpop.f32.mrb[0].mxu0
        %v669 = vpop.f32.mrb[0].mxu0
        %v670 = vadd.f32 0.0, %v669
        %v671 = vpop.f32.mrb[0].mxu0
        %672 = vdwg.mxu0
        %v673 = vadd.f32 %v553, %v667
        %v674 = vadd.f32 %v556, %v670
        %v675 = vld [vmem:[%s2] sm:$0x1]
        %v677 = vlaneseq
        %v678 = vshrl.u32 %v677, 7
        %v679 = vsub.s32 0, %v678
        %v680 = vrot.slane %v675, %v679
        %v682 = vadd.f32 %v673, %v680
        %v683 = vadd.f32 %v674, %v680
        %vm684 = vcmp.ge.f32.partialorder %v682, 0.0
        %vm685 = vcmp.ge.f32.partialorder %v683, 0.0
        %v686 = vmul.f32 %v682, 0.01
        %v687 = vmul.f32 %v683, 0.01
        %v688 = vsel %vm684, %v682, %v686
        %v689 = vsel %vm685, %v683, %v687
        %v690 = vpack.c.bf16 %v689, %v688
        %v692 = vunpack.c.l.b16 %v690
        %v693 = vunpack.c.h.b16 %v690
        %v694 = vpack.c.b16 %v692, %v692
        %v695 = vpack.c.b16 %v693, %v693
        %v697 = vshrl.u32 %v694, 16
        %v699 = vrot.slane %v697, 7
        %v700 = vshll.u32 %v694, 16
        %v702 = vor.u32 %v699, %v700
        %v703 = vrot.slane %v699, 4
        %v705 = vshrl.u32 %v695, 16
        %v707 = vrot.slane %v705, 7
        %v708 = vshll.u32 %v695, 16
        %v710 = vor.u32 %v707, %v708
        %v711 = vsel %vm293, %v703, %v710
        %v712 = vrot.slane %v707, 4
        %v716 = vsel %vm315, %v702, %v323
        %717 = vst [vmem:[#allocation2] sm:$0xf] %v716
        %718 = vst [vmem:[#allocation2 + $0x4] sm:$0xf] %v711
        %v719 = vld [vmem:[#allocation2 + $0x8] sm:$0x1]
        %v720 = vsel %vm275, %v712, %v719
        %721 = vst [vmem:[#allocation2 + $0x8] sm:$0x1] %v720
        %v722 = vld [vmem:[#allocation2] sm:$0xf]
        %v723 = vld [vmem:[#allocation2 + $0x4] sm:$0xf]
        %v724 = vld [vmem:[#allocation8] sm:$0xf]
        %v725 = vld [vmem:[#allocation8 + $0x4] sm:$0xf]
        %v726 = vld [vmem:[#allocation8 + $0x8] sm:$0xf]
        %v727 = vld [vmem:[#allocation8 + $0xc] sm:$0xf]
        %v728 = vld [vmem:[#allocation8 + $0x10] sm:$0xf]
        %v729 = vld [vmem:[#allocation8 + $0x14] sm:$0xf]
        %v730 = vld [vmem:[#allocation8 + $0x18] sm:$0xf]
        %v731 = vld [vmem:[#allocation8 + $0x1c] sm:$0xf]
        %v732 = vld [vmem:[#allocation8 + $0x20] sm:$0xf]
        %v733 = vld [vmem:[#allocation8 + $0x24] sm:$0xf]
        %v734 = vld [vmem:[#allocation8 + $0x28] sm:$0xf]
        %v735 = vld [vmem:[#allocation8 + $0x2c] sm:$0xf]
        %v736 = vld [vmem:[#allocation8 + $0x30] sm:$0xf]
        %v737 = vld [vmem:[#allocation8 + $0x34] sm:$0xf]
        %v738 = vld [vmem:[#allocation8 + $0x38] sm:$0xf]
        %v739 = vld [vmem:[#allocation8 + $0x3c] sm:$0xf]
        %v740 = vld [vmem:[#allocation2 + $0x8] sm:$0x1]
        %v741 = vld [vmem:[#allocation8 + $0x40] sm:$0xf]
        %v742 = vld [vmem:[#allocation8 + $0x44] sm:$0xf]
        %v743 = vld [vmem:[#allocation8 + $0x48] sm:$0xf]
        %v744 = vld [vmem:[#allocation8 + $0x4c] sm:$0xf]
        %v745 = vld [vmem:[#allocation8 + $0x50] sm:$0xf]
        %v746 = vld [vmem:[#allocation8 + $0x54] sm:$0xf]
        %v747 = vld [vmem:[#allocation8 + $0x58] sm:$0xf]
        %v748 = vld [vmem:[#allocation8 + $0x5c] sm:$0xf]
        %v749 = vld [vmem:[#allocation8 + $0x60] sm:$0xf]
        %v750 = vld [vmem:[#allocation8 + $0x64] sm:$0xf]
        %v751 = vld [vmem:[#allocation8 + $0x68] sm:$0xf]
        %v752 = vld [vmem:[#allocation8 + $0x6c] sm:$0xf]
        %v753 = vld [vmem:[#allocation8 + $0x70] sm:$0xf]
        %v754 = vld [vmem:[#allocation8 + $0x74] sm:$0xf]
        %v755 = vld [vmem:[#allocation8 + $0x78] sm:$0xf]
        %v756 = vld [vmem:[#allocation8 + $0x7c] sm:$0xf]
        %v760 = vunpack.c.l.b16 %v722
        %v761 = vunpack.c.l.b16 %v723
        %v762 = vunpack.c.l.b16 %v740
        %v763 = vpack.c.b16 %v761, %v760
        %v764 = vpack.c.b16 %v762, %v762
        %v766 = vshrl.u32 %v763, 16
        %v768 = vshll.u32 %v763, 16
        %v770 = vrot.slane %v768, 1
        %v771 = vor.u32 %v766, %v770
        %v773 = vshll.u32 %v764, 16
        %v775 = vrot.slane %v773, 1
        %v776 = vsel %vm366, %v771, %v775
        %v794 = vunpack.c.l.b16 %v741
        %v795 = vunpack.c.l.b16 %v742
        %v796 = vunpack.c.l.b16 %v743
        %v797 = vunpack.c.l.b16 %v744
        %v798 = vunpack.c.l.b16 %v745
        %v799 = vunpack.c.l.b16 %v746
        %v800 = vunpack.c.l.b16 %v747
        %v801 = vunpack.c.l.b16 %v748
        %v802 = vunpack.c.l.b16 %v749
        %v803 = vunpack.c.l.b16 %v750
        %v804 = vunpack.c.l.b16 %v751
        %v805 = vunpack.c.l.b16 %v752
        %v806 = vunpack.c.l.b16 %v753
        %v807 = vunpack.c.l.b16 %v754
        %v808 = vunpack.c.l.b16 %v755
        %v809 = vunpack.c.l.b16 %v756
        %v810 = vpack.c.b16 %v795, %v794
        %v811 = vpack.c.b16 %v797, %v796
        %v812 = vpack.c.b16 %v799, %v798
        %v813 = vpack.c.b16 %v801, %v800
        %v814 = vpack.c.b16 %v803, %v802
        %v815 = vpack.c.b16 %v805, %v804
        %v816 = vpack.c.b16 %v807, %v806
        %v817 = vpack.c.b16 %v809, %v808
        %826 = vmatprep.subr.bf16.mxu0 0
        %827 = vmatpush1.bf16.msra.mxu0 %v810
        %828 = vmatprep.subr.bf16.mxu0 0
        %829 = vmatpush1.bf16.msra.mxu0 %v811
        %830 = vmatprep.subr.bf16.mxu0 0
        %831 = vmatpush1.bf16.msra.mxu0 %v812
        %832 = vmatprep.subr.bf16.mxu0 0
        %833 = vmatpush1.bf16.msra.mxu0 %v813
        %834 = vmatprep.subr.bf16.mxu0 0
        %835 = vmatpush1.bf16.msra.mxu0 %v814
        %836 = vmatprep.subr.bf16.mxu0 0
        %837 = vmatpush1.bf16.msra.mxu0 %v815
        %838 = vmatprep.subr.bf16.mxu0 0
        %839 = vmatpush1.bf16.msra.mxu0 %v816
        %840 = vmatprep.subr.bf16.mxu0 0
        %841 = vmatpush1.bf16.msra.mxu0 %v817
        %842 = vmatprep.subr.bf16.mxu0 0
        %843 = vmatpush1.bf16.msra.mxu0 0
        %844 = vmatprep.subr.bf16.mxu0 0
        %845 = vmatpush1.bf16.msra.mxu0 0
        %846 = vmatprep.subr.bf16.mxu0 0
        %847 = vmatpush1.bf16.msra.mxu0 0
        %848 = vmatprep.subr.bf16.mxu0 0
        %849 = vmatpush1.bf16.msra.mxu0 0
        %850 = vmatprep.subr.bf16.mxu0 0
        %851 = vmatpush1.bf16.msra.mxu0 0
        %852 = vmatprep.subr.bf16.mxu0 0
        %853 = vmatpush1.bf16.msra.mxu0 0
        %854 = vmatprep.subr.bf16.mxu0 0
        %855 = vmatpush1.bf16.msra.mxu0 0
        %856 = vmatprep.subr.bf16.mxu0 0
        %857 = vmatpush1.bf16.msra.mxu0 0
        %858 = vmatprep.mubr.bf16.mxu0 0
        %859 = vmatmul.mubr.bf16.gmra.mrb[0].mxu0 %v776
        %v860 = vpop.f32.mrb[0].mxu0
        %v861 = vadd.f32 0.0, %v860
        %v862 = vpop.f32.mrb[0].mxu0
        %v863 = vpop.f32.mrb[0].mxu0
        %v864 = vadd.f32 0.0, %v863
        %v865 = vpop.f32.mrb[0].mxu0
        %866 = vdwg.mxu0
        %v884 = vunpack.c.l.b16 %v724
        %v885 = vunpack.c.l.b16 %v725
        %v886 = vunpack.c.l.b16 %v726
        %v887 = vunpack.c.l.b16 %v727
        %v888 = vunpack.c.l.b16 %v728
        %v889 = vunpack.c.l.b16 %v729
        %v890 = vunpack.c.l.b16 %v730
        %v891 = vunpack.c.l.b16 %v731
        %v892 = vunpack.c.l.b16 %v732
        %v893 = vunpack.c.l.b16 %v733
        %v894 = vunpack.c.l.b16 %v734
        %v895 = vunpack.c.l.b16 %v735
        %v896 = vunpack.c.l.b16 %v736
        %v897 = vunpack.c.l.b16 %v737
        %v898 = vunpack.c.l.b16 %v738
        %v899 = vunpack.c.l.b16 %v739
        %v900 = vpack.c.b16 %v885, %v884
        %v901 = vpack.c.b16 %v887, %v886
        %v902 = vpack.c.b16 %v889, %v888
        %v903 = vpack.c.b16 %v891, %v890
        %v904 = vpack.c.b16 %v893, %v892
        %v905 = vpack.c.b16 %v895, %v894
        %v906 = vpack.c.b16 %v897, %v896
        %v907 = vpack.c.b16 %v899, %v898
        %916 = vmatprep.subr.bf16.mxu0 0
        %917 = vmatpush1.bf16.msra.mxu0 %v900
        %918 = vmatprep.subr.bf16.mxu0 0
        %919 = vmatpush1.bf16.msra.mxu0 %v901
        %920 = vmatprep.subr.bf16.mxu0 0
        %921 = vmatpush1.bf16.msra.mxu0 %v902
        %922 = vmatprep.subr.bf16.mxu0 0
        %923 = vmatpush1.bf16.msra.mxu0 %v903
        %924 = vmatprep.subr.bf16.mxu0 0
        %925 = vmatpush1.bf16.msra.mxu0 %v904
        %926 = vmatprep.subr.bf16.mxu0 0
        %927 = vmatpush1.bf16.msra.mxu0 %v905
        %928 = vmatprep.subr.bf16.mxu0 0
        %929 = vmatpush1.bf16.msra.mxu0 %v906
        %930 = vmatprep.subr.bf16.mxu0 0
        %931 = vmatpush1.bf16.msra.mxu0 %v907
        %932 = vmatprep.subr.bf16.mxu0 0
        %933 = vmatpush1.bf16.msra.mxu0 0
        %934 = vmatprep.subr.bf16.mxu0 0
        %935 = vmatpush1.bf16.msra.mxu0 0
        %936 = vmatprep.subr.bf16.mxu0 0
        %937 = vmatpush1.bf16.msra.mxu0 0
        %938 = vmatprep.subr.bf16.mxu0 0
        %939 = vmatpush1.bf16.msra.mxu0 0
        %940 = vmatprep.subr.bf16.mxu0 0
        %941 = vmatpush1.bf16.msra.mxu0 0
        %942 = vmatprep.subr.bf16.mxu0 0
        %943 = vmatpush1.bf16.msra.mxu0 0
        %944 = vmatprep.subr.bf16.mxu0 0
        %945 = vmatpush1.bf16.msra.mxu0 0
        %946 = vmatprep.subr.bf16.mxu0 0
        %947 = vmatpush1.bf16.msra.mxu0 0
        %948 = vmatprep.mubr.bf16.mxu0 0
        %949 = vmatmul.mubr.bf16.gmra.mrb[0].mxu0 %v763
        %v950 = vpop.f32.mrb[0].mxu0
        %v951 = vadd.f32 %v861, %v950
        %v952 = vpop.f32.mrb[0].mxu0
        %v953 = vpop.f32.mrb[0].mxu0
        %v954 = vadd.f32 %v864, %v953
        %v955 = vpop.f32.mrb[0].mxu0
        %956 = vdwg.mxu0
        %v957 = vld [vmem:[#allocation2] sm:$0xe]
        %v958 = vld [vmem:[#allocation8 + $0x80] sm:$0xf]
        %v959 = vld [vmem:[#allocation8 + $0x84] sm:$0xf]
        %v960 = vld [vmem:[#allocation8 + $0x88] sm:$0xf]
        %v961 = vld [vmem:[#allocation8 + $0x8c] sm:$0xf]
        %v962 = vld [vmem:[#allocation8 + $0x90] sm:$0xf]
        %v963 = vld [vmem:[#allocation8 + $0x94] sm:$0xf]
        %v964 = vld [vmem:[#allocation8 + $0x98] sm:$0xf]
        %v965 = vld [vmem:[#allocation8 + $0x9c] sm:$0xf]
        %v966 = vld [vmem:[#allocation8 + $0xa0] sm:$0xf]
        %v967 = vld [vmem:[#allocation8 + $0xa4] sm:$0xf]
        %v968 = vld [vmem:[#allocation8 + $0xa8] sm:$0xf]
        %v969 = vld [vmem:[#allocation8 + $0xac] sm:$0xf]
        %v970 = vld [vmem:[#allocation8 + $0xb0] sm:$0xf]
        %v971 = vld [vmem:[#allocation8 + $0xb4] sm:$0xf]
        %v972 = vld [vmem:[#allocation8 + $0xb8] sm:$0xf]
        %v973 = vld [vmem:[#allocation8 + $0xbc] sm:$0xf]
        %v975 = vunpack.c.l.b16 %v957
        %v976 = vpack.c.b16 %v761, %v975
        %v977 = vrot.slane %v976, 1
        %v978 = vrot.slane %v764, 1
        %v979 = vsel %vm579, %v977, %v978
        %v997 = vunpack.c.l.b16 %v958
        %v998 = vunpack.c.l.b16 %v959
        %v999 = vunpack.c.l.b16 %v960
        %v1000 = vunpack.c.l.b16 %v961
        %v1001 = vunpack.c.l.b16 %v962
        %v1002 = vunpack.c.l.b16 %v963
        %v1003 = vunpack.c.l.b16 %v964
        %v1004 = vunpack.c.l.b16 %v965
        %v1005 = vunpack.c.l.b16 %v966
        %v1006 = vunpack.c.l.b16 %v967
        %v1007 = vunpack.c.l.b16 %v968
        %v1008 = vunpack.c.l.b16 %v969
        %v1009 = vunpack.c.l.b16 %v970
        %v1010 = vunpack.c.l.b16 %v971
        %v1011 = vunpack.c.l.b16 %v972
        %v1012 = vunpack.c.l.b16 %v973
        %v1013 = vpack.c.b16 %v998, %v997
        %v1014 = vpack.c.b16 %v1000, %v999
        %v1015 = vpack.c.b16 %v1002, %v1001
        %v1016 = vpack.c.b16 %v1004, %v1003
        %v1017 = vpack.c.b16 %v1006, %v1005
        %v1018 = vpack.c.b16 %v1008, %v1007
        %v1019 = vpack.c.b16 %v1010, %v1009
        %v1020 = vpack.c.b16 %v1012, %v1011
        %1029 = vmatprep.subr.bf16.mxu0 0
        %1030 = vmatpush1.bf16.msra.mxu0 %v1013
        %1031 = vmatprep.subr.bf16.mxu0 0
        %1032 = vmatpush1.bf16.msra.mxu0 %v1014
        %1033 = vmatprep.subr.bf16.mxu0 0
        %1034 = vmatpush1.bf16.msra.mxu0 %v1015
        %1035 = vmatprep.subr.bf16.mxu0 0
        %1036 = vmatpush1.bf16.msra.mxu0 %v1016
        %1037 = vmatprep.subr.bf16.mxu0 0
        %1038 = vmatpush1.bf16.msra.mxu0 %v1017
        %1039 = vmatprep.subr.bf16.mxu0 0
        %1040 = vmatpush1.bf16.msra.mxu0 %v1018
        %1041 = vmatprep.subr.bf16.mxu0 0
        %1042 = vmatpush1.bf16.msra.mxu0 %v1019
        %1043 = vmatprep.subr.bf16.mxu0 0
        %1044 = vmatpush1.bf16.msra.mxu0 %v1020
        %1045 = vmatprep.subr.bf16.mxu0 0
        %1046 = vmatpush1.bf16.msra.mxu0 0
        %1047 = vmatprep.subr.bf16.mxu0 0
        %1048 = vmatpush1.bf16.msra.mxu0 0
        %1049 = vmatprep.subr.bf16.mxu0 0
        %1050 = vmatpush1.bf16.msra.mxu0 0
        %1051 = vmatprep.subr.bf16.mxu0 0
        %1052 = vmatpush1.bf16.msra.mxu0 0
        %1053 = vmatprep.subr.bf16.mxu0 0
        %1054 = vmatpush1.bf16.msra.mxu0 0
        %1055 = vmatprep.subr.bf16.mxu0 0
        %1056 = vmatpush1.bf16.msra.mxu0 0
        %1057 = vmatprep.subr.bf16.mxu0 0
        %1058 = vmatpush1.bf16.msra.mxu0 0
        %1059 = vmatprep.subr.bf16.mxu0 0
        %1060 = vmatpush1.bf16.msra.mxu0 0
        %1061 = vmatprep.mubr.bf16.mxu0 0
        %1062 = vmatmul.mubr.bf16.gmra.mrb[0].mxu0 %v979
        %v1063 = vpop.f32.mrb[0].mxu0
        %v1064 = vadd.f32 0.0, %v1063
        %v1065 = vpop.f32.mrb[0].mxu0
        %v1066 = vpop.f32.mrb[0].mxu0
        %v1067 = vadd.f32 0.0, %v1066
        %v1068 = vpop.f32.mrb[0].mxu0
        %1069 = vdwg.mxu0
        %v1070 = vadd.f32 %v951, %v1064
        %v1071 = vadd.f32 %v954, %v1067
        %v1072 = vld [vmem:[%s4] sm:$0x1]
        %v1074 = vlaneseq
        %v1075 = vshrl.u32 %v1074, 7
        %v1076 = vsub.s32 0, %v1075
        %v1077 = vrot.slane %v1072, %v1076
        %v1079 = vadd.f32 %v1070, %v1077
        %v1080 = vadd.f32 %v1071, %v1077
        %v1081 = vld [vmem:[%s237] sm:$0xff]
        %v1082 = vld [vmem:[%s237 + $0x8] sm:$0xff]
        %v1083 = vadd.f32 %v1081, %v1079
        %v1084 = vadd.f32 %v1082, %v1080
        %1085 = vst [vmem:[%s271] sm:$0xff] %v1083
        %1086 = vst [vmem:[%s271 + $0x8] sm:$0xff] %v1084
        %s1087 = sand.u32 %s141, 1
        %s1088 = scalar_lea.sflag [#allocation5], %s1087
        %s1089 = sand.u32 %s141, 1
        %s1090 = smul.addr %s1089, 16
        %s1091 = scalar_lea.vmem [#allocation9], %s1090
        // Predicated region
        $region53: #{tpu_custom_call.1} parent=39 // pred_check
          %p1092 = pneg %p151
        $region54: #{tpu_custom_call.1} parent=39 // pred_check_branch
          %1094 = sbr.rel (%p1092) target = $region56
        $region55: #{tpu_custom_call.1} parent=39 // pred_region
          %s1096 = ssub.s32 256, 256
          %1097 = vsyncadd %s1088, %s1096
          %s1098 = smul.addr %s23, 2
          %s1099 = smul.addr %s1098, 128
          %s1100 = scalar_lea.hbm %s5, %s1099
          %s1101 = sshll.u32 %s1091, 4
          %s1102 = int_to_ptr.vmem [resolvable:$true] %s1101
          %1107 = dma.vmem_to_hbm [thread:$0]  %s1102, 256, %s1100, %s1088, 128, 128, 8
        $region56: #{tpu_custom_call.1} parent=39 // pred_fallthru
          _
      $region40: #{tpu_custom_call.1} parent=5 // pred_fallthru
        _
      %p1108 = scmp.le.s32.totalorder 2, %s18
      // Predicated region
      $region57: #{tpu_custom_call.1} parent=5 // pred_check
        %p1109 = pneg %p1108
      $region58: #{tpu_custom_call.1} parent=5 // pred_check_branch
        %1111 = sbr.rel (%p1109) target = $region60
      $region59: #{tpu_custom_call.1} parent=5 // pred_region
        %s1112 = ssub.s32 %s18, 2
        // Predicated region
        $region61: #{tpu_custom_call.1} parent=59 // pred_check
          %p1113 = pneg %p157
        $region62: #{tpu_custom_call.1} parent=59 // pred_check_branch
          %1115 = sbr.rel (%p1113) target = $region64
        $region63: #{tpu_custom_call.1} parent=59 // pred_region
          %s1116 = sand.u32 %s142, 1
          %s1117 = scalar_lea.sflag [#allocation5], %s1116
          %s1118 = sand.u32 %s142, 1
          %s1119 = smul.addr %s1118, 16
          %s1120 = scalar_lea.vmem [#allocation9], %s1119
          %1121 = dma.done %s1117, 256
        $region64: #{tpu_custom_call.1} parent=59 // pred_fallthru
          _
      $region60: #{tpu_custom_call.1} parent=5 // pred_fallthru
        _
    $region6: #{tpu_custom_call.1} parent=1 // loop_footer
      %s22 = sadd.s32 1, %s18
    $region7: #{tpu_custom_call.1} parent=1 // loop_footer_branch
      %17 = sbr.rel target = $region3
    $region8: #{tpu_custom_call.1} parent=1 // loop_exit
      _
    %1122 = vsyncpa [#allocation4], 1
    %s1123 = scalar_lea.sflag [#allocation4], 1
    %1124 = vsyncpa %s1123, 1
    %1125 = vsyncpa [#allocation7], 1
    %1126 = vsyncpa [#allocation5], 1
    %s1127 = scalar_lea.sflag [#allocation5], 1
    %1128 = vsyncpa %s1127, 1

</llo_original>
